<compile_context>
chip_gen: v5e
topology: v5e:2x2
jax: 0.10.0
libtpu: 0.0.40
codegen_flags: <defaults>
</compile_context>

<pallas_src>
import functools

import jax
import jax.numpy as jnp
from jax.experimental import pallas as pl
from jax.experimental.pallas import tpu as pltpu


LANE = 128      # vreg lane width
SUBLANE = 8     # vreg sublane count (f32)


def _round_up(v, m):
    return (v + m - 1) // m * m


# ----------------------------- Pallas kernel ------------------------------ #
def _gcn_stack_kernel(a_ref, x_ref, w_ref, b_ref, o_ref, *, n_layers, dims):
    """Fused n-layer GCN for one batch column.

    a_ref: [Np, Np]            dense normalized adjacency (resident)
    x_ref: [Np, Fp]            input node features (batch dim squeezed)
    w_ref: [L, Fp, Fp]         zero-padded stacked layer weights (resident)
    b_ref: [L, 1, Fp]          zero-padded stacked biases (resident)
    o_ref: [Np, Fp]            lane-dense output slab
    """
    a = a_ref[...]
    h = x_ref[...].astype(jnp.float32)
    for l in range(n_layers):                 # static unroll, n_layers small
        w = w_ref[l]                          # [Fp, Fp]  (static index)
        bias = b_ref[l]                       # [1, Fp]
        f_in, f_out = dims[l], dims[l + 1]
        # Put the narrower feature width on the N^2 aggregation matmul.
        if f_in <= f_out:
            h = jnp.dot(a, h, preferred_element_type=jnp.float32)
            h = jnp.dot(h, w, preferred_element_type=jnp.float32)
        else:
            h = jnp.dot(h, w, preferred_element_type=jnp.float32)
            h = jnp.dot(a, h, preferred_element_type=jnp.float32)
        h = h + bias
        if l < n_layers - 1:                  # nonlin() == nn.ReLU()
            h = jnp.maximum(h, 0.0)
    o_ref[...] = h.astype(o_ref.dtype)


def gcn_stack(a_hat, x, weights, biases, dims):
    """Run the whole conv stack in one pallas_call.

    a_hat:   [N, N] dense symmetric-normalized adjacency (shared over batch)
    x:       [B, N, F_in]
    returns: [B, N, out_dim]
    """
    n_layers = len(weights)
    batch, n, f_in = x.shape
    out_dim = dims[-1]

    n_pad = _round_up(max(n, SUBLANE), SUBLANE)
    f_pad = _round_up(max(dims), LANE)

    # Zero-pad everything once in the wrapper; padded nodes / features are
    # exactly zero and stay zero through every matmul / bias / ReLU.
    a_p = jnp.zeros((n_pad, n_pad), jnp.float32).at[:n, :n].set(a_hat)
    x_p = jnp.zeros((batch, n_pad, f_pad), jnp.float32).at[:, :n, :f_in].set(x)
    w_p = jnp.zeros((n_layers, f_pad, f_pad), jnp.float32)
    b_p = jnp.zeros((n_layers, 1, f_pad), jnp.float32)
    for i, (w, bi) in enumerate(zip(weights, biases)):
        w_p = w_p.at[i, :dims[i], :dims[i + 1]].set(w)
        b_p = b_p.at[i, 0, :dims[i + 1]].set(jnp.reshape(bi, (-1,)))

    kernel = functools.partial(_gcn_stack_kernel, n_layers=n_layers,
                               dims=tuple(dims))

    out = pl.pallas_call(
        kernel,
        out_shape=jax.ShapeDtypeStruct((batch, n_pad, f_pad), jnp.float32),
        grid=(batch,),
        in_specs=[
            # Constant block index -> A_hat / W / b stay resident across the
            # batch grid axis (no re-DMA per step).
            pl.BlockSpec((n_pad, n_pad), lambda b: (0, 0)),
            pl.BlockSpec((None, n_pad, f_pad), lambda b: (b, 0, 0)),
            pl.BlockSpec((n_layers, f_pad, f_pad), lambda b: (0, 0, 0)),
            pl.BlockSpec((n_layers, 1, f_pad), lambda b: (0, 0, 0)),
        ],
        out_specs=pl.BlockSpec((None, n_pad, f_pad), lambda b: (b, 0, 0)),
        compiler_params=pltpu.CompilerParams(
            dimension_semantics=("parallel",)),
    )(a_p, x_p, w_p, b_p)

    return out[:, :n, :out_dim]


# ------------------------------- GNN module -------------------------------- #
class GNNBase:
    """JAX/Pallas port of the PyTorch GNNBase forward pass (ReLU nonlin)."""

    def __init__(self, in_dim, hid_dim, out_dim, n_layers, key):
        self.in_dim, self.hid_dim, self.out_dim = in_dim, hid_dim, out_dim
        self.n_layers = n_layers
        self.dims = [in_dim] + [hid_dim] * (n_layers - 1) + [out_dim]

        self.weights, self.biases = [], []
        keys = jax.random.split(key, n_layers)
        for i in range(n_layers):
            wk, bk = jax.random.split(keys[i])
            w = (jax.random.normal(wk, (self.dims[i], self.dims[i + 1]),
                                   jnp.float32)
                 / jnp.sqrt(jnp.float32(self.dims[i])))
            b = 0.01 * jax.random.normal(bk, (1, self.dims[i + 1]), jnp.float32)
            self.weights.append(w)
            self.biases.append(b)

    def forward(self, a_hat, x):
        # Mirrors the reference: for 3-D input the conv stack operates in the
        # node-first [N, B, F] layout; the intermediate `.squeeze()` calls are
        # no-ops for non-degenerate shapes, so only the final squeeze /
        # permute-back is reproduced here (all layers run in one fused kernel).
        if x.ndim == 3:                                  # [B, N, F]
            out = gcn_stack(a_hat, x, self.weights, self.biases, self.dims)
            out = jnp.transpose(out, (1, 0, 2))          # reference layout
            out = jnp.squeeze(out)                       # reference .squeeze()
            if out.ndim == 3:
                out = jnp.transpose(out, (1, 0, 2))      # back to [B, N, F]
            return out
        out = gcn_stack(a_hat, x[None], self.weights, self.biases,
                        self.dims)[0]                    # [N, out_dim]
        return jnp.squeeze(out)


# --------------------------- pure-JAX reference ----------------------------- #
def gcn_reference(a_hat, x, weights, biases, n_layers):
    if x.ndim == 3:
        x = jnp.transpose(x, (1, 0, 2))                  # [N, B, F]

    def conv(h, w, b):
        if h.ndim == 2:
            return a_hat @ h @ w + b
        return jnp.einsum('nm,mbf->nbf', a_hat, h) @ w + b

    for i in range(n_layers - 1):
        x = jnp.squeeze(jnp.maximum(conv(x, weights[i], biases[i]), 0.0))
    x = jnp.squeeze(conv(x, weights[-1], biases[-1]))
    if x.ndim == 3:
        return jnp.transpose(x, (1, 0, 2))
    return x


# ------------------------------- graph glue -------------------------------- #
def normalized_adjacency(key, n_nodes):
    """Dense symmetric GCN normalization: D^-1/2 (A + I) D^-1/2."""
    a = (jax.random.uniform(key, (n_nodes, n_nodes)) < 0.3).astype(jnp.float32)
    a = jnp.maximum(a, a.T)                          # symmetrize
    a = a + jnp.eye(n_nodes, dtype=jnp.float32)      # self loops
    deg = jnp.sum(a, axis=1)
    d_inv_sqrt = 1.0 / jnp.sqrt(deg)
    return a * d_inv_sqrt[:, None] * d_inv_sqrt[None, :]


# ---------------------------------- main ----------------------------------- #
if __name__ == "__main__":
    key = jax.random.PRNGKey(0)
    k_graph, k_x2, k_x3, k_params = jax.random.split(key, 4)

    N, IN_DIM, HID_DIM, OUT_DIM, N_LAYERS, BATCH = 16, 8, 32, 8, 3, 2

    a_hat = normalized_adjacency(k_graph, N)                  # [16, 16]
    model = GNNBase(IN_DIM, HID_DIM, OUT_DIM, N_LAYERS, k_params)

    # 2-D path: x = [N, F_in]
    x2 = jax.random.normal(k_x2, (N, IN_DIM), jnp.float32)
    out2 = jax.block_until_ready(model.forward(a_hat, x2))
    ref2 = gcn_reference(a_hat, x2, model.weights, model.biases, N_LAYERS)
    assert out2.shape == (N, OUT_DIM), out2.shape
    assert bool(jnp.allclose(out2, ref2, rtol=2e-2, atol=2e-2)), \
        float(jnp.max(jnp.abs(out2 - ref2)))

    # 3-D path: x = [B, N, F_in] (batch of signals on a shared graph)
    x3 = jax.random.normal(k_x3, (BATCH, N, IN_DIM), jnp.float32)
    out3 = jax.block_until_ready(model.forward(a_hat, x3))
    ref3 = gcn_reference(a_hat, x3, model.weights, model.biases, N_LAYERS)
    assert out3.shape == (BATCH, N, OUT_DIM), out3.shape
    assert bool(jnp.allclose(out3, ref3, rtol=2e-2, atol=2e-2)), \
        float(jnp.max(jnp.abs(out3 - ref3)))

    assert bool(jnp.all(jnp.isfinite(out2))) and bool(jnp.all(jnp.isfinite(out3)))
    print("KERNEL_OK")
</pallas_src>

<mosaic_0001>
module attributes {stable_mosaic.version = 11 : i64} {
  func.func @_gcn_stack_kernel(%arg0: i32, %arg1: memref<16x16xf32, #tpu.memory_space<vmem>>, %arg2: memref<1x16x128xf32, #tpu.memory_space<vmem>>, %arg3: memref<3x128x128xf32, #tpu.memory_space<vmem>>, %arg4: memref<3x1x128xf32, #tpu.memory_space<vmem>>, %arg5: memref<1x16x128xf32, #tpu.memory_space<vmem>>) attributes {dimension_semantics = [#tpu.dimension_semantics<parallel>], iteration_bounds = array<i64: 1>, scalar_prefetch = 0 : i64, scratch_operands = 0 : i64, tpu.core_type = #tpu.core_type<tc>, window_params = [{pipeline_mode = #tpu.pipeline_mode<synchronous>, transform_indices = @transform_0, window_bounds = array<i64: 16, 16>}, {transform_indices = @transform_1, window_bounds = array<i64: 1, 16, 128>}, {pipeline_mode = #tpu.pipeline_mode<synchronous>, transform_indices = @transform_2, window_bounds = array<i64: 3, 128, 128>}, {pipeline_mode = #tpu.pipeline_mode<synchronous>, transform_indices = @transform_3, window_bounds = array<i64: 3, 1, 128>}, {transform_indices = @transform_4, window_bounds = array<i64: 1, 16, 128>}]} {
    %c0 = arith.constant 0 : index
    %c0_0 = arith.constant 0 : index
    %0 = vector.load %arg1[%c0, %c0_0] : memref<16x16xf32, #tpu.memory_space<vmem>>, vector<16x16xf32>
    %c0_1 = arith.constant 0 : index
    %c0_2 = arith.constant 0 : index
    %c0_3 = arith.constant 0 : index
    %1 = vector.load %arg2[%c0_1, %c0_2, %c0_3] : memref<1x16x128xf32, #tpu.memory_space<vmem>>, vector<1x16x128xf32>
    %2 = vector.shape_cast %1 : vector<1x16x128xf32> to vector<16x128xf32>
    %c0_4 = arith.constant 0 : index
    %c0_5 = arith.constant 0 : index
    %c0_6 = arith.constant 0 : index
    %3 = vector.load %arg3[%c0_4, %c0_5, %c0_6] : memref<3x128x128xf32, #tpu.memory_space<vmem>>, vector<1x128x128xf32>
    %4 = vector.shape_cast %3 : vector<1x128x128xf32> to vector<128x128xf32>
    %c0_7 = arith.constant 0 : index
    %c0_8 = arith.constant 0 : index
    %c0_9 = arith.constant 0 : index
    %5 = vector.load %arg4[%c0_7, %c0_8, %c0_9] : memref<3x1x128xf32, #tpu.memory_space<vmem>>, vector<1x1x128xf32>
    %6 = vector.shape_cast %5 : vector<1x1x128xf32> to vector<1x128xf32>
    %cst = arith.constant dense<0.000000e+00> : vector<16x128xf32>
    %7 = tpu.matmul %0, %2, %cst {dimension_numbers = #tpu.dot_dimension_numbers<[1], [0], [0], [1], [0, 0, 1, 1], [], []>} : vector<16x16xf32>, vector<16x128xf32>, vector<16x128xf32> -> vector<16x128xf32>
    %cst_10 = arith.constant dense<0.000000e+00> : vector<16x128xf32>
    %8 = tpu.matmul %7, %4, %cst_10 {dimension_numbers = #tpu.dot_dimension_numbers<[1], [0], [0], [1], [0, 0, 1, 1], [], []>} : vector<16x128xf32>, vector<128x128xf32>, vector<16x128xf32> -> vector<16x128xf32>
    %9 = vector.broadcast %6 : vector<1x128xf32> to vector<16x128xf32>
    %10 = arith.addf %8, %9 : vector<16x128xf32>
    %cst_11 = arith.constant 0.000000e+00 : f32
    %11 = vector.broadcast %cst_11 : f32 to vector<16x128xf32>
    %12 = arith.maximumf %10, %11 : vector<16x128xf32>
    %c1 = arith.constant 1 : index
    %c0_12 = arith.constant 0 : index
    %c0_13 = arith.constant 0 : index
    %13 = vector.load %arg3[%c1, %c0_12, %c0_13] : memref<3x128x128xf32, #tpu.memory_space<vmem>>, vector<1x128x128xf32>
    %14 = vector.shape_cast %13 : vector<1x128x128xf32> to vector<128x128xf32>
    %c1_14 = arith.constant 1 : index
    %c0_15 = arith.constant 0 : index
    %c0_16 = arith.constant 0 : index
    %15 = vector.load %arg4[%c1_14, %c0_15, %c0_16] : memref<3x1x128xf32, #tpu.memory_space<vmem>>, vector<1x1x128xf32>
    %16 = vector.shape_cast %15 : vector<1x1x128xf32> to vector<1x128xf32>
    %cst_17 = arith.constant dense<0.000000e+00> : vector<16x128xf32>
    %17 = tpu.matmul %0, %12, %cst_17 {dimension_numbers = #tpu.dot_dimension_numbers<[1], [0], [0], [1], [0, 0, 1, 1], [], []>} : vector<16x16xf32>, vector<16x128xf32>, vector<16x128xf32> -> vector<16x128xf32>
    %cst_18 = arith.constant dense<0.000000e+00> : vector<16x128xf32>
    %18 = tpu.matmul %17, %14, %cst_18 {dimension_numbers = #tpu.dot_dimension_numbers<[1], [0], [0], [1], [0, 0, 1, 1], [], []>} : vector<16x128xf32>, vector<128x128xf32>, vector<16x128xf32> -> vector<16x128xf32>
    %19 = vector.broadcast %16 : vector<1x128xf32> to vector<16x128xf32>
    %20 = arith.addf %18, %19 : vector<16x128xf32>
    %cst_19 = arith.constant 0.000000e+00 : f32
    %21 = vector.broadcast %cst_19 : f32 to vector<16x128xf32>
    %22 = arith.maximumf %20, %21 : vector<16x128xf32>
    %c2 = arith.constant 2 : index
    %c0_20 = arith.constant 0 : index
    %c0_21 = arith.constant 0 : index
    %23 = vector.load %arg3[%c2, %c0_20, %c0_21] : memref<3x128x128xf32, #tpu.memory_space<vmem>>, vector<1x128x128xf32>
    %24 = vector.shape_cast %23 : vector<1x128x128xf32> to vector<128x128xf32>
    %c2_22 = arith.constant 2 : index
    %c0_23 = arith.constant 0 : index
    %c0_24 = arith.constant 0 : index
    %25 = vector.load %arg4[%c2_22, %c0_23, %c0_24] : memref<3x1x128xf32, #tpu.memory_space<vmem>>, vector<1x1x128xf32>
    %26 = vector.shape_cast %25 : vector<1x1x128xf32> to vector<1x128xf32>
    %cst_25 = arith.constant dense<0.000000e+00> : vector<16x128xf32>
    %27 = tpu.matmul %22, %24, %cst_25 {dimension_numbers = #tpu.dot_dimension_numbers<[1], [0], [0], [1], [0, 0, 1, 1], [], []>} : vector<16x128xf32>, vector<128x128xf32>, vector<16x128xf32> -> vector<16x128xf32>
    %cst_26 = arith.constant dense<0.000000e+00> : vector<16x128xf32>
    %28 = tpu.matmul %0, %27, %cst_26 {dimension_numbers = #tpu.dot_dimension_numbers<[1], [0], [0], [1], [0, 0, 1, 1], [], []>} : vector<16x16xf32>, vector<16x128xf32>, vector<16x128xf32> -> vector<16x128xf32>
    %29 = vector.broadcast %26 : vector<1x128xf32> to vector<16x128xf32>
    %30 = arith.addf %28, %29 : vector<16x128xf32>
    %c0_27 = arith.constant 0 : index
    %c0_28 = arith.constant 0 : index
    %c0_29 = arith.constant 0 : index
    %31 = vector.load %arg5[%c0_27, %c0_28, %c0_29] : memref<1x16x128xf32, #tpu.memory_space<vmem>>, vector<1x16x128xf32>
    %32 = vector.shape_cast %31 : vector<1x16x128xf32> to vector<16x128xf32>
    %33 = vector.shape_cast %30 : vector<16x128xf32> to vector<1x16x128xf32>
    tpu.vector_store %arg5[%c0_27, %c0_28, %c0_29], %33 {strides = array<i32>} : memref<1x16x128xf32, #tpu.memory_space<vmem>>, vector<1x16x128xf32>,
    return
  }
  func.func @transform_0(%arg0: i32) -> (i32, i32) {
    %c0_i32 = arith.constant 0 : i32
    %c0_i32_0 = arith.constant 0 : i32
    %c0_i32_1 = arith.constant 0 : i32
    return %c0_i32, %c0_i32_0 : i32, i32
  }
  func.func @transform_1(%arg0: i32) -> (i32, i32, i32) {
    %c0_i32 = arith.constant 0 : i32
    %c0_i32_0 = arith.constant 0 : i32
    %c0_i32_1 = arith.constant 0 : i32
    return %arg0, %c0_i32, %c0_i32_0 : i32, i32, i32
  }
  func.func @transform_2(%arg0: i32) -> (i32, i32, i32) {
    %c0_i32 = arith.constant 0 : i32
    %c0_i32_0 = arith.constant 0 : i32
    %c0_i32_1 = arith.constant 0 : i32
    %c0_i32_2 = arith.constant 0 : i32
    return %c0_i32, %c0_i32_0, %c0_i32_1 : i32, i32, i32
  }
  func.func @transform_3(%arg0: i32) -> (i32, i32, i32) {
    %c0_i32 = arith.constant 0 : i32
    %c0_i32_0 = arith.constant 0 : i32
    %c0_i32_1 = arith.constant 0 : i32
    %c0_i32_2 = arith.constant 0 : i32
    return %c0_i32, %c0_i32_0, %c0_i32_1 : i32, i32, i32
  }
  func.func @transform_4(%arg0: i32) -> (i32, i32, i32) {
    %c0_i32 = arith.constant 0 : i32
    %c0_i32_0 = arith.constant 0 : i32
    %c0_i32_1 = arith.constant 0 : i32
    return %arg0, %c0_i32, %c0_i32_0 : i32, i32, i32
  }
}

</mosaic_0001>

<llo_original>
// kernel: tpu_custom_call.1
$region0: #{tpu_custom_call.1}
  #allocation0 [shape = 'u32[]', space=smem, size = 0x4, offset = 0x4, fixed_abs, tag = 'smem constant byte address 0x4 - core index']
  #allocation1 [shape = 'u32[72,128]{1,0:T(1,128)}', space=vmem, size = 0x9000, scoped, tag = 'internal scratch']
  %s0 = inlined_call_operand.hbm [shape: f32[16,16], index: 0, kind: input, shape index: {}]
  %s1 = inlined_call_operand.hbm [shape: f32[1,16,128], index: 1, kind: input, shape index: {}]
  %s2 = inlined_call_operand.hbm [shape: f32[3,128,128], index: 2, kind: input, shape index: {}]
  %s3 = inlined_call_operand.hbm [shape: f32[3,1,128], index: 3, kind: input, shape index: {}]
  %s4 = inlined_call_operand.hbm [shape: f32[1,16,128], index: 4, kind: output, shape index: {}]
  %s5 = sld [smem:[#allocation0]]
  $region42: #{tpu_custom_call.1} parent=0
    _
  %s7 = ssub.s32 1, %s5
  %s8 = scalar_select 0, %s7, %s5
  $region1: #{tpu_custom_call.1} parent=0
    #allocation2 [shape = 'u8[8192]{0}', space=vmem, size = 0x2000, scoped, tag = 'input window, operand 0, single buffered']
    #allocation3 [shape = 's32[1]{0}', space=sflag, size = 0x4, scoped, tag = 'scoped memory for tpu_custom_call.1']
    #allocation4 [shape = 's32[1]{0}', space=sflag, size = 0x4, scoped, tag = 'scoped memory for tpu_custom_call.1']
    #allocation5 [shape = 'u8[8192]{0}', space=vmem, size = 0x2000, scoped, tag = 'input window, operand 1, single buffered']
    #allocation6 [shape = 's32[1]{0}', space=sflag, size = 0x4, scoped, tag = 'scoped memory for tpu_custom_call.1']
    #allocation7 [shape = 'u8[196608]{0}', space=vmem, size = 0x30000, scoped, tag = 'input window, operand 2, single buffered']
    #allocation8 [shape = 'u8[1536]{0}', space=vmem, size = 0x800, scoped, tag = 'input window, operand 3, single buffered']
    #allocation9 [shape = 's32[1]{0}', space=sflag, size = 0x4, scoped, tag = 'scoped memory for tpu_custom_call.1']
    #allocation10 [shape = 'u8[8192]{0}', space=vmem, size = 0x2000, scoped, tag = 'output window, operand 0, single buffered']
    %9 = vsyncpa [#allocation3], 0
    %10 = vsyncpa [#allocation6], 0
    %11 = vsyncpa [#allocation9], 0
    %12 = vsyncpa [#allocation4], 0
    // Predicated region
    $region2: #{tpu_custom_call.1} parent=1 // pred_check
      _
    $region3: #{tpu_custom_call.1} parent=1 // pred_check_branch
      %14 = sbr.rel (0) target = $region5
    $region4: #{tpu_custom_call.1} parent=1 // pred_region
      %16 = vsyncadd [#allocation3], 0
      %s17 = sshll.u32 %s0, 4
      %s18 = int_to_ptr.hbm [resolvable:$true] %s17
      %s19 = sshll.u32 [#allocation2], 4
      %s20 = int_to_ptr.vmem [resolvable:$true] %s19
      %25 = dma.hbm_to_vmem [thread:$0]  %s18, 256, %s20, [#allocation3], 128, 128, 8
    $region5: #{tpu_custom_call.1} parent=1 // pred_fallthru
      _
    // Predicated region
    $region6: #{tpu_custom_call.1} parent=1 // pred_check
      _
    $region7: #{tpu_custom_call.1} parent=1 // pred_check_branch
      %27 = sbr.rel (0) target = $region9
    $region8: #{tpu_custom_call.1} parent=1 // pred_region
      %29 = vsyncadd [#allocation6], 0
      %s30 = sshll.u32 %s1, 4
      %s31 = int_to_ptr.hbm [resolvable:$true] %s30
      %s32 = sshll.u32 [#allocation5], 4
      %s33 = int_to_ptr.vmem [resolvable:$true] %s32
      %38 = dma.hbm_to_vmem [thread:$0]  %s31, 256, %s33, [#allocation6], 128, 128, 8
    $region9: #{tpu_custom_call.1} parent=1 // pred_fallthru
      _
    // Predicated region
    $region10: #{tpu_custom_call.1} parent=1 // pred_check
      _
    $region11: #{tpu_custom_call.1} parent=1 // pred_check_branch
      %40 = sbr.rel (0) target = $region13
    $region12: #{tpu_custom_call.1} parent=1 // pred_region
      %42 = vsyncadd [#allocation6], 0
      %s43 = sshll.u32 %s2, 4
      %s44 = int_to_ptr.hbm [resolvable:$true] %s43
      %s45 = sshll.u32 [#allocation7], 4
      %s46 = int_to_ptr.vmem [resolvable:$true] %s45
      %51 = dma.hbm_to_vmem [thread:$0]  %s44, 6144, %s46, [#allocation6], 128, 128, 8
    $region13: #{tpu_custom_call.1} parent=1 // pred_fallthru
      _
    // Predicated region
    $region14: #{tpu_custom_call.1} parent=1 // pred_check
      _
    $region15: #{tpu_custom_call.1} parent=1 // pred_check_branch
      %53 = sbr.rel (0) target = $region17
    $region16: #{tpu_custom_call.1} parent=1 // pred_region
      %55 = vsyncadd [#allocation9], 0
      %s56 = sshll.u32 %s3, 4
      %s57 = int_to_ptr.hbm [resolvable:$true] %s56
      %s58 = sshll.u32 [#allocation8], 4
      %s59 = int_to_ptr.vmem [resolvable:$true] %s58
      %64 = dma.hbm_to_vmem [thread:$0]  %s57, 48, %s59, [#allocation9], 16, 16, 1
    $region17: #{tpu_custom_call.1} parent=1 // pred_fallthru
      _
    // Predicated region
    $region18: #{tpu_custom_call.1} parent=1 // pred_check
      _
    $region19: #{tpu_custom_call.1} parent=1 // pred_check_branch
      %66 = sbr.rel (0) target = $region21
    $region20: #{tpu_custom_call.1} parent=1 // pred_region
      %68 = dma.done [#allocation3], 256
    $region21: #{tpu_custom_call.1} parent=1 // pred_fallthru
      _
    // Predicated region
    $region22: #{tpu_custom_call.1} parent=1 // pred_check
      _
    $region23: #{tpu_custom_call.1} parent=1 // pred_check_branch
      %70 = sbr.rel (0) target = $region25
    $region24: #{tpu_custom_call.1} parent=1 // pred_region
      %72 = dma.done [#allocation6], 256
    $region25: #{tpu_custom_call.1} parent=1 // pred_fallthru
      _
    // Predicated region
    $region26: #{tpu_custom_call.1} parent=1 // pred_check
      _
    $region27: #{tpu_custom_call.1} parent=1 // pred_check_branch
      %74 = sbr.rel (0) target = $region29
    $region28: #{tpu_custom_call.1} parent=1 // pred_region
      %76 = dma.done [#allocation6], 6144
    $region29: #{tpu_custom_call.1} parent=1 // pred_fallthru
      _
    // Predicated region
    $region30: #{tpu_custom_call.1} parent=1 // pred_check
      _
    $region31: #{tpu_custom_call.1} parent=1 // pred_check_branch
      %78 = sbr.rel (0) target = $region33
    $region32: #{tpu_custom_call.1} parent=1 // pred_region
      %80 = dma.done [#allocation9], 48
    $region33: #{tpu_custom_call.1} parent=1 // pred_fallthru
      _
    %v81 = vld [vmem:[#allocation2] sm:$0xff]
    %v82 = vld [vmem:[#allocation2 + $0x8] sm:$0xff]
    %v83 = vld [vmem:[#allocation5] sm:$0xff]
    %v84 = vld [vmem:[#allocation5 + $0x8] sm:$0xff]
    %v85 = vld [vmem:[#allocation7] sm:$0xff]
    %v86 = vld [vmem:[#allocation7 + $0x8] sm:$0xff]
    %v87 = vld [vmem:[#allocation7 + $0x10] sm:$0xff]
    %v88 = vld [vmem:[#allocation7 + $0x18] sm:$0xff]
    %v89 = vld [vmem:[#allocation7 + $0x20] sm:$0xff]
    %v90 = vld [vmem:[#allocation7 + $0x28] sm:$0xff]
    %v91 = vld [vmem:[#allocation7 + $0x30] sm:$0xff]
    %v92 = vld [vmem:[#allocation7 + $0x38] sm:$0xff]
    %v93 = vld [vmem:[#allocation7 + $0x40] sm:$0xff]
    %v94 = vld [vmem:[#allocation7 + $0x48] sm:$0xff]
    %v95 = vld [vmem:[#allocation7 + $0x50] sm:$0xff]
    %v96 = vld [vmem:[#allocation7 + $0x58] sm:$0xff]
    %v97 = vld [vmem:[#allocation7 + $0x60] sm:$0xff]
    %v98 = vld [vmem:[#allocation7 + $0x68] sm:$0xff]
    %v99 = vld [vmem:[#allocation7 + $0x70] sm:$0xff]
    %v100 = vld [vmem:[#allocation7 + $0x78] sm:$0xff]
    %v101 = vld [vmem:[#allocation8] sm:$0x1]
    %vm102 = vcmask 130048
    %v104 = vsel %vm102, %v81, 0
    %v107 = vsel %vm102, %v82, 0
    %109 = vmatpush.msra.mxu0 0.0
    %110 = vmatpush.msra.mxu0 0.0
    %111 = vmatpush.msra.mxu0 0.0
    %112 = vmatpush.msra.mxu0 0.0
    %113 = vmatpush.msra.mxu0 0.0
    %114 = vmatpush.msra.mxu0 0.0
    %115 = vmatpush.msra.mxu0 0.0
    %116 = vmatpush.msra.mxu0 0.0
    %117 = vmatpush.msra.mxu0 0.0
    %118 = vmatpush.msra.mxu0 0.0
    %119 = vmatpush.msra.mxu0 0.0
    %120 = vmatpush.msra.mxu0 0.0
    %121 = vmatpush.msra.mxu0 0.0
    %122 = vmatpush.msra.mxu0 0.0
    %123 = vmatpush.msra.mxu0 %v84
    %124 = vmatpush.msra.mxu0 %v83
    %125 = vmatmul.f32.gmra.mxu0 %v104
    %v126 = vpop.f32.mrf.mxu0
    %v127 = vadd.f32 0.0, %v126
    %128 = vmatmul.f32.gmra.mxu0 %v107
    %v129 = vpop.f32.mrf.mxu0
    %v130 = vadd.f32 0.0, %v129
    %131 = vdwg.mxu0
    %v133 = vperm.slane %v101, 0
    %135 = vmatpush.msra.mxu0 %v100
    %136 = vmatpush.msra.mxu0 %v99
    %137 = vmatpush.msra.mxu0 %v98
    %138 = vmatpush.msra.mxu0 %v97
    %139 = vmatpush.msra.mxu0 %v96
    %140 = vmatpush.msra.mxu0 %v95
    %141 = vmatpush.msra.mxu0 %v94
    %142 = vmatpush.msra.mxu0 %v93
    %143 = vmatpush.msra.mxu0 %v92
    %144 = vmatpush.msra.mxu0 %v91
    %145 = vmatpush.msra.mxu0 %v90
    %146 = vmatpush.msra.mxu0 %v89
    %147 = vmatpush.msra.mxu0 %v88
    %148 = vmatpush.msra.mxu0 %v87
    %149 = vmatpush.msra.mxu0 %v86
    %150 = vmatpush.msra.mxu0 %v85
    %151 = vmatmul.f32.gmra.mxu0 %v127
    %v152 = vpop.f32.mrf.mxu0
    %v153 = vadd.f32 %v133, %v152
    %154 = vmatmul.f32.gmra.mxu0 %v130
    %v155 = vpop.f32.mrf.mxu0
    %v156 = vadd.f32 %v133, %v155
    %157 = vdwg.mxu0
    %v158 = vmax.f32 %v153, 0.0
    %v159 = vmax.f32 %v156, 0.0
    %s160 = scalar_lea.vmem [#allocation7], 128
    %v161 = vld [vmem:[%s160] sm:$0xff]
    %v162 = vld [vmem:[%s160 + $0x8] sm:$0xff]
    %v163 = vld [vmem:[%s160 + $0x10] sm:$0xff]
    %v164 = vld [vmem:[%s160 + $0x18] sm:$0xff]
    %v165 = vld [vmem:[%s160 + $0x20] sm:$0xff]
    %v166 = vld [vmem:[%s160 + $0x28] sm:$0xff]
    %v167 = vld [vmem:[%s160 + $0x30] sm:$0xff]
    %v168 = vld [vmem:[%s160 + $0x38] sm:$0xff]
    %v169 = vld [vmem:[%s160 + $0x40] sm:$0xff]
    %v170 = vld [vmem:[%s160 + $0x48] sm:$0xff]
    %v171 = vld [vmem:[%s160 + $0x50] sm:$0xff]
    %v172 = vld [vmem:[%s160 + $0x58] sm:$0xff]
    %v173 = vld [vmem:[%s160 + $0x60] sm:$0xff]
    %v174 = vld [vmem:[%s160 + $0x68] sm:$0xff]
    %v175 = vld [vmem:[%s160 + $0x70] sm:$0xff]
    %v176 = vld [vmem:[%s160 + $0x78] sm:$0xff]
    %s177 = scalar_lea.vmem [#allocation8], 1
    %v178 = vld [vmem:[%s177] sm:$0x1]
    %179 = vmatpush.msra.mxu0 0.0
    %180 = vmatpush.msra.mxu0 0.0
    %181 = vmatpush.msra.mxu0 0.0
    %182 = vmatpush.msra.mxu0 0.0
    %183 = vmatpush.msra.mxu0 0.0
    %184 = vmatpush.msra.mxu0 0.0
    %185 = vmatpush.msra.mxu0 0.0
    %186 = vmatpush.msra.mxu0 0.0
    %187 = vmatpush.msra.mxu0 0.0
    %188 = vmatpush.msra.mxu0 0.0
    %189 = vmatpush.msra.mxu0 0.0
    %190 = vmatpush.msra.mxu0 0.0
    %191 = vmatpush.msra.mxu0 0.0
    %192 = vmatpush.msra.mxu0 0.0
    %193 = vmatpush.msra.mxu0 %v159
    %194 = vmatpush.msra.mxu0 %v158
    %195 = vmatmul.f32.gmra.mxu0 %v104
    %v196 = vpop.f32.mrf.mxu0
    %v197 = vadd.f32 0.0, %v196
    %198 = vmatmul.f32.gmra.mxu0 %v107
    %v199 = vpop.f32.mrf.mxu0
    %v200 = vadd.f32 0.0, %v199
    %201 = vdwg.mxu0
    %v203 = vperm.slane %v178, 0
    %205 = vmatpush.msra.mxu0 %v176
    %206 = vmatpush.msra.mxu0 %v175
    %207 = vmatpush.msra.mxu0 %v174
    %208 = vmatpush.msra.mxu0 %v173
    %209 = vmatpush.msra.mxu0 %v172
    %210 = vmatpush.msra.mxu0 %v171
    %211 = vmatpush.msra.mxu0 %v170
    %212 = vmatpush.msra.mxu0 %v169
    %213 = vmatpush.msra.mxu0 %v168
    %214 = vmatpush.msra.mxu0 %v167
    %215 = vmatpush.msra.mxu0 %v166
    %216 = vmatpush.msra.mxu0 %v165
    %217 = vmatpush.msra.mxu0 %v164
    %218 = vmatpush.msra.mxu0 %v163
    %219 = vmatpush.msra.mxu0 %v162
    %220 = vmatpush.msra.mxu0 %v161
    %221 = vmatmul.f32.gmra.mxu0 %v197
    %v222 = vpop.f32.mrf.mxu0
    %v223 = vadd.f32 %v203, %v222
    %224 = vmatmul.f32.gmra.mxu0 %v200
    %v225 = vpop.f32.mrf.mxu0
    %v226 = vadd.f32 %v203, %v225
    %227 = vdwg.mxu0
    %v228 = vmax.f32 %v223, 0.0
    %v229 = vmax.f32 %v226, 0.0
    %s230 = scalar_lea.vmem [#allocation7], 256
    %v231 = vld [vmem:[%s230] sm:$0xff]
    %v232 = vld [vmem:[%s230 + $0x8] sm:$0xff]
    %v233 = vld [vmem:[%s230 + $0x10] sm:$0xff]
    %v234 = vld [vmem:[%s230 + $0x18] sm:$0xff]
    %v235 = vld [vmem:[%s230 + $0x20] sm:$0xff]
    %v236 = vld [vmem:[%s230 + $0x28] sm:$0xff]
    %v237 = vld [vmem:[%s230 + $0x30] sm:$0xff]
    %v238 = vld [vmem:[%s230 + $0x38] sm:$0xff]
    %v239 = vld [vmem:[%s230 + $0x40] sm:$0xff]
    %v240 = vld [vmem:[%s230 + $0x48] sm:$0xff]
    %v241 = vld [vmem:[%s230 + $0x50] sm:$0xff]
    %v242 = vld [vmem:[%s230 + $0x58] sm:$0xff]
    %v243 = vld [vmem:[%s230 + $0x60] sm:$0xff]
    %v244 = vld [vmem:[%s230 + $0x68] sm:$0xff]
    %v245 = vld [vmem:[%s230 + $0x70] sm:$0xff]
    %v246 = vld [vmem:[%s230 + $0x78] sm:$0xff]
    %s247 = scalar_lea.vmem [#allocation8], 2
    %v248 = vld [vmem:[%s247] sm:$0x1]
    %249 = vmatpush.msra.mxu0 %v246
    %250 = vmatpush.msra.mxu0 %v245
    %251 = vmatpush.msra.mxu0 %v244
    %252 = vmatpush.msra.mxu0 %v243
    %253 = vmatpush.msra.mxu0 %v242
    %254 = vmatpush.msra.mxu0 %v241
    %255 = vmatpush.msra.mxu0 %v240
    %256 = vmatpush.msra.mxu0 %v239
    %257 = vmatpush.msra.mxu0 %v238
    %258 = vmatpush.msra.mxu0 %v237
    %259 = vmatpush.msra.mxu0 %v236
    %260 = vmatpush.msra.mxu0 %v235
    %261 = vmatpush.msra.mxu0 %v234
    %262 = vmatpush.msra.mxu0 %v233
    %263 = vmatpush.msra.mxu0 %v232
    %264 = vmatpush.msra.mxu0 %v231
    %265 = vmatmul.f32.gmra.mxu0 %v228
    %v266 = vpop.f32.mrf.mxu0
    %v267 = vadd.f32 0.0, %v266
    %268 = vmatmul.f32.gmra.mxu0 %v229
    %v269 = vpop.f32.mrf.mxu0
    %v270 = vadd.f32 0.0, %v269
    %271 = vdwg.mxu0
    %v273 = vperm.slane %v248, 0
    %275 = vmatpush.msra.mxu0 0.0
    %276 = vmatpush.msra.mxu0 0.0
    %277 = vmatpush.msra.mxu0 0.0
    %278 = vmatpush.msra.mxu0 0.0
    %279 = vmatpush.msra.mxu0 0.0
    %280 = vmatpush.msra.mxu0 0.0
    %281 = vmatpush.msra.mxu0 0.0
    %282 = vmatpush.msra.mxu0 0.0
    %283 = vmatpush.msra.mxu0 0.0
    %284 = vmatpush.msra.mxu0 0.0
    %285 = vmatpush.msra.mxu0 0.0
    %286 = vmatpush.msra.mxu0 0.0
    %287 = vmatpush.msra.mxu0 0.0
    %288 = vmatpush.msra.mxu0 0.0
    %289 = vmatpush.msra.mxu0 %v270
    %290 = vmatpush.msra.mxu0 %v267
    %291 = vmatmul.f32.gmra.mxu0 %v104
    %v292 = vpop.f32.mrf.mxu0
    %v293 = vadd.f32 %v273, %v292
    %294 = vmatmul.f32.gmra.mxu0 %v107
    %v295 = vpop.f32.mrf.mxu0
    %v296 = vadd.f32 %v273, %v295
    %297 = vdwg.mxu0
    %298 = vst [vmem:[#allocation10] sm:$0xff] %v293
    %299 = vst [vmem:[#allocation10 + $0x8] sm:$0xff] %v296
    // Predicated region
    $region34: #{tpu_custom_call.1} parent=1 // pred_check
      _
    $region35: #{tpu_custom_call.1} parent=1 // pred_check_branch
      %301 = sbr.rel (0) target = $region37
    $region36: #{tpu_custom_call.1} parent=1 // pred_region
      %303 = vsyncadd [#allocation4], 0
      %s304 = sshll.u32 [#allocation10], 4
      %s305 = int_to_ptr.vmem [resolvable:$true] %s304
      %s306 = sshll.u32 %s4, 4
      %s307 = int_to_ptr.hbm [resolvable:$true] %s306
      %312 = dma.vmem_to_hbm [thread:$0]  %s305, 256, %s307, [#allocation4], 128, 128, 8
    $region37: #{tpu_custom_call.1} parent=1 // pred_fallthru
      _
    // Predicated region
    $region38: #{tpu_custom_call.1} parent=1 // pred_check
      _
    $region39: #{tpu_custom_call.1} parent=1 // pred_check_branch
      %314 = sbr.rel (0) target = $region41
    $region40: #{tpu_custom_call.1} parent=1 // pred_region
      %316 = dma.done [#allocation4], 256
    $region41: #{tpu_custom_call.1} parent=1 // pred_fallthru
      _
    %317 = vsyncpa [#allocation3], 1
    %318 = vsyncpa [#allocation6], 1
    %319 = vsyncpa [#allocation9], 1
    %320 = vsyncpa [#allocation4], 1

</llo_original>
